<compile_context>
chip_gen: v5e
topology: v5e:2x2
jax: 0.10.0
libtpu: 0.0.40
codegen_flags: <defaults>
</compile_context>

<pallas_src>
import functools

import jax
import jax.numpy as jnp
from jax.experimental import pallas as pl
from jax.experimental.pallas import tpu as pltpu


def _round_up(x, m):
    return (x + m - 1) // m * m


def _patch_linear_kernel(x_ref, w_ref, b_ref, o_ref):
    # x_ref: (TM, Kp)  bf16 row tile of flattened patches
    # w_ref: (Kp, Dp)  bf16 weight (x @ W.T layout), VMEM-resident
    # b_ref: (1,  Dp)  f32 bias
    # o_ref: (TM, Dp)  f32 lane-dense output tile
    acc = jnp.dot(x_ref[...], w_ref[...], preferred_element_type=jnp.float32)
    o_ref[...] = (acc + b_ref[...]).astype(o_ref.dtype)


@functools.partial(jax.jit, static_argnums=(3, 4))
def vit_forward(x, weight, bias, patch_size, dim):
    """Replicates ViT.forward: rearrange into patches then nn.Linear(ppc, dim).

    x:      (B, 3, H, W) float32, NCHW
    weight: (dim, ppc)   float32  (PyTorch nn.Linear convention)
    bias:   (dim,)       float32
    returns (B, N, dim)  float32, N = (H/patch)*(W/patch)
    """
    B, C, H, W = x.shape
    p = patch_size
    hh, ww = H // p, W // p
    N = hh * ww
    ppc = C * p * p

    # Rearrange: b c (h p1) (w p2) -> (b h w) (c p1 p2), flattened to 2D rows.
    patches = (
        x.reshape(B, C, hh, p, ww, p)
         .transpose(0, 2, 4, 1, 3, 5)
         .reshape(B * N, ppc)
    )

    rows = B * N
    # Row tile: multiple of 128 (MXU-aligned, lane-dense), capped at 512 so
    # tiles comfortably fit v7x's smaller scoped VMEM even at ViT-Base sizes.
    TM = 512 if rows >= 512 else _round_up(rows, 128)
    rows_p = _round_up(rows, TM)
    Kp = _round_up(ppc, 128)
    Dp = _round_up(dim, 128)

    # bf16 inputs for the MXU; zero padding on K/D contributes nothing.
    patches_p = jnp.pad(patches.astype(jnp.bfloat16),
                        ((0, rows_p - rows), (0, Kp - ppc)))
    w_p = jnp.pad(weight.T.astype(jnp.bfloat16),
                  ((0, Kp - ppc), (0, Dp - dim)))
    b_p = jnp.pad(bias.astype(jnp.float32), (0, Dp - dim)).reshape(1, Dp)

    out_p = pl.pallas_call(
        _patch_linear_kernel,
        out_shape=jax.ShapeDtypeStruct((rows_p, Dp), jnp.float32),
        grid_spec=pltpu.PrefetchScalarGridSpec(
            num_scalar_prefetch=0,
            grid=(rows_p // TM,),
            in_specs=[
                pl.BlockSpec((TM, Kp), lambda i: (i, 0)),
                pl.BlockSpec((Kp, Dp), lambda i: (0, 0)),
                pl.BlockSpec((1, Dp), lambda i: (0, 0)),
            ],
            out_specs=pl.BlockSpec((TM, Dp), lambda i: (i, 0)),
        ),
        compiler_params=pltpu.CompilerParams(
            dimension_semantics=("parallel",)),
    )(patches_p, w_p, b_p)

    return out_p[:rows, :dim].reshape(B, N, dim)


if __name__ == "__main__":
    # Small, forward-consistent shapes: patch_size=4, img 16x16, dim=32.
    # ViT hardcodes 3 input channels (ppc = patch_size**2 * 3).
    patch_size = 4
    H = Wd = 16
    dim = 32
    B, C = 2, 3
    N = (H // patch_size) * (Wd // patch_size)     # 16
    ppc = patch_size * patch_size * C              # 48

    key = jax.random.PRNGKey(0)
    kx, kw, kb, kpos = jax.random.split(key, 4)

    x = jax.random.normal(kx, (B, C, H, Wd), dtype=jnp.float32)

    # Deterministic nn.Linear-style init: U(-1/sqrt(ppc), 1/sqrt(ppc))
    bound = 1.0 / (ppc ** 0.5)
    weight = jax.random.uniform(kw, (dim, ppc), jnp.float32, -bound, bound)
    bias = jax.random.uniform(kb, (dim,), jnp.float32, -bound, bound)

    out = vit_forward(x, weight, bias, patch_size, dim)
    out = jax.block_until_ready(out)

    # The PyTorch forward also draws torch.randn(N+1, ppc) positional
    # embeddings but never uses them in the returned value; mirrored here as
    # dead code for fidelity.
    _pos_embeddings = jax.random.normal(kpos, (N + 1, ppc), dtype=jnp.float32)

    # Sanity check against a pure-JAX f32 reference (bf16 MXU inputs -> looser
    # tolerance than the original f32 run).
    patches_ref = (
        x.reshape(B, C, H // patch_size, patch_size, Wd // patch_size, patch_size)
         .transpose(0, 2, 4, 1, 3, 5)
         .reshape(B, N, ppc)
    )
    ref = patches_ref @ weight.T + bias
    assert out.shape == (B, N, dim)
    assert jnp.allclose(out, ref, atol=3e-2, rtol=3e-2), \
        float(jnp.max(jnp.abs(out - ref)))

    print("KERNEL_OK")
</pallas_src>

<mosaic_0001>
module attributes {stable_mosaic.version = 11 : i64} {
  func.func @_patch_linear_kernel(%arg0: i32, %arg1: memref<128x128xbf16, #tpu.memory_space<vmem>>, %arg2: memref<128x128xbf16, #tpu.memory_space<vmem>>, %arg3: memref<1x128xf32, #tpu.memory_space<vmem>>, %arg4: memref<128x128xf32, #tpu.memory_space<vmem>>) attributes {dimension_semantics = [#tpu.dimension_semantics<parallel>], iteration_bounds = array<i64: 1>, scalar_prefetch = 0 : i64, scratch_operands = 0 : i64, tpu.core_type = #tpu.core_type<tc>, window_params = [{transform_indices = @transform_0, window_bounds = array<i64: 128, 128>}, {pipeline_mode = #tpu.pipeline_mode<synchronous>, transform_indices = @transform_1, window_bounds = array<i64: 128, 128>}, {pipeline_mode = #tpu.pipeline_mode<synchronous>, transform_indices = @transform_2, window_bounds = array<i64: 1, 128>}, {transform_indices = @transform_3, window_bounds = array<i64: 128, 128>}]} {
    %c0 = arith.constant 0 : index
    %c0_0 = arith.constant 0 : index
    %0 = vector.load %arg1[%c0, %c0_0] : memref<128x128xbf16, #tpu.memory_space<vmem>>, vector<128x128xbf16>
    %c0_1 = arith.constant 0 : index
    %c0_2 = arith.constant 0 : index
    %1 = vector.load %arg2[%c0_1, %c0_2] : memref<128x128xbf16, #tpu.memory_space<vmem>>, vector<128x128xbf16>
    %cst = arith.constant dense<0.000000e+00> : vector<128x128xf32>
    %2 = tpu.matmul %0, %1, %cst {dimension_numbers = #tpu.dot_dimension_numbers<[1], [0], [0], [1], [0, 0, 1, 1], [], []>} : vector<128x128xbf16>, vector<128x128xbf16>, vector<128x128xf32> -> vector<128x128xf32>
    %c0_3 = arith.constant 0 : index
    %c0_4 = arith.constant 0 : index
    %3 = vector.load %arg3[%c0_3, %c0_4] : memref<1x128xf32, #tpu.memory_space<vmem>>, vector<1x128xf32>
    %4 = vector.broadcast %3 : vector<1x128xf32> to vector<128x128xf32>
    %5 = arith.addf %2, %4 : vector<128x128xf32>
    %c0_5 = arith.constant 0 : index
    %c0_6 = arith.constant 0 : index
    %6 = vector.load %arg4[%c0_5, %c0_6] : memref<128x128xf32, #tpu.memory_space<vmem>>, vector<128x128xf32>
    tpu.vector_store %arg4[%c0_5, %c0_6], %5 {strides = array<i32>} : memref<128x128xf32, #tpu.memory_space<vmem>>, vector<128x128xf32>,
    return
  }
  func.func @transform_0(%arg0: i32) -> (i32, i32) {
    %c0_i32 = arith.constant 0 : i32
    %c0_i32_0 = arith.constant 0 : i32
    return %arg0, %c0_i32 : i32, i32
  }
  func.func @transform_1(%arg0: i32) -> (i32, i32) {
    %c0_i32 = arith.constant 0 : i32
    %c0_i32_0 = arith.constant 0 : i32
    %c0_i32_1 = arith.constant 0 : i32
    return %c0_i32, %c0_i32_0 : i32, i32
  }
  func.func @transform_2(%arg0: i32) -> (i32, i32) {
    %c0_i32 = arith.constant 0 : i32
    %c0_i32_0 = arith.constant 0 : i32
    %c0_i32_1 = arith.constant 0 : i32
    return %c0_i32, %c0_i32_0 : i32, i32
  }
  func.func @transform_3(%arg0: i32) -> (i32, i32) {
    %c0_i32 = arith.constant 0 : i32
    %c0_i32_0 = arith.constant 0 : i32
    return %arg0, %c0_i32 : i32, i32
  }
}

</mosaic_0001>

<llo_original>
// kernel: vit_forward.1
$region0: #{vit_forward.1}
  #allocation0 [shape = 'u32[]', space=smem, size = 0x4, offset = 0x4, fixed_abs, tag = 'smem constant byte address 0x4 - core index']
  #allocation1 [shape = 'u32[72,128]{1,0:T(1,128)}', space=vmem, size = 0x9000, scoped, tag = 'internal scratch']
  %s0 = inlined_call_operand.vmem [shape: bf16[128,128], index: 0, kind: input, shape index: {}]
  %s1 = inlined_call_operand.vmem [shape: bf16[128,128], index: 1, kind: input, shape index: {}]
  %s2 = inlined_call_operand.vmem [shape: f32[1,128], index: 2, kind: input, shape index: {}]
  %s3 = inlined_call_operand.vmem [shape: f32[128,128], index: 3, kind: output, shape index: {}]
  %s4 = sld [smem:[#allocation0]]
  $region22: #{vit_forward.1} parent=0
    _
  %s6 = ssub.s32 1, %s4
  %s7 = scalar_select 0, %s6, %s4
  // Predicated region
  $region2: #{vit_forward.1} parent=0 // pred_check
    _
  $region3: #{vit_forward.1} parent=0 // pred_check_branch
    %9 = sbr.rel (0) target = $region5
  $region4: #{vit_forward.1} parent=0 // pred_region
    _
  $region5: #{vit_forward.1} parent=0 // pred_fallthru
    _
  // Predicated region
  $region6: #{vit_forward.1} parent=0 // pred_check
    _
  $region7: #{vit_forward.1} parent=0 // pred_check_branch
    %11 = sbr.rel (0) target = $region9
  $region8: #{vit_forward.1} parent=0 // pred_region
    _
  $region9: #{vit_forward.1} parent=0 // pred_fallthru
    _
  // Predicated region
  $region10: #{vit_forward.1} parent=0 // pred_check
    _
  $region11: #{vit_forward.1} parent=0 // pred_check_branch
    %13 = sbr.rel (0) target = $region13
  $region12: #{vit_forward.1} parent=0 // pred_region
    _
  $region13: #{vit_forward.1} parent=0 // pred_fallthru
    _
  %v14 = vld [vmem:[%s0] sm:$0xf]
  %v15 = vld [vmem:[%s0 + $0x4] sm:$0xf]
  %v16 = vld [vmem:[%s0 + $0x8] sm:$0xf]
  %v17 = vld [vmem:[%s0 + $0xc] sm:$0xf]
  %v18 = vld [vmem:[%s0 + $0x10] sm:$0xf]
  %v19 = vld [vmem:[%s0 + $0x14] sm:$0xf]
  %v20 = vld [vmem:[%s0 + $0x18] sm:$0xf]
  %v21 = vld [vmem:[%s0 + $0x1c] sm:$0xf]
  %v22 = vld [vmem:[%s0 + $0x20] sm:$0xf]
  %v23 = vld [vmem:[%s0 + $0x24] sm:$0xf]
  %v24 = vld [vmem:[%s0 + $0x28] sm:$0xf]
  %v25 = vld [vmem:[%s0 + $0x2c] sm:$0xf]
  %v26 = vld [vmem:[%s0 + $0x30] sm:$0xf]
  %v27 = vld [vmem:[%s0 + $0x34] sm:$0xf]
  %v28 = vld [vmem:[%s0 + $0x38] sm:$0xf]
  %v29 = vld [vmem:[%s0 + $0x3c] sm:$0xf]
  %v30 = vld [vmem:[%s1] sm:$0xf]
  %v31 = vld [vmem:[%s1 + $0x4] sm:$0xf]
  %v32 = vld [vmem:[%s1 + $0x8] sm:$0xf]
  %v33 = vld [vmem:[%s1 + $0xc] sm:$0xf]
  %v34 = vld [vmem:[%s1 + $0x10] sm:$0xf]
  %v35 = vld [vmem:[%s1 + $0x14] sm:$0xf]
  %v36 = vld [vmem:[%s1 + $0x18] sm:$0xf]
  %v37 = vld [vmem:[%s1 + $0x1c] sm:$0xf]
  %v38 = vld [vmem:[%s1 + $0x20] sm:$0xf]
  %v39 = vld [vmem:[%s1 + $0x24] sm:$0xf]
  %v40 = vld [vmem:[%s1 + $0x28] sm:$0xf]
  %v41 = vld [vmem:[%s1 + $0x2c] sm:$0xf]
  %v42 = vld [vmem:[%s1 + $0x30] sm:$0xf]
  %v43 = vld [vmem:[%s1 + $0x34] sm:$0xf]
  %v44 = vld [vmem:[%s1 + $0x38] sm:$0xf]
  %v45 = vld [vmem:[%s1 + $0x3c] sm:$0xf]
  %v46 = vld [vmem:[%s2] sm:$0x1]
  %v48 = vperm.slane %v46, 0
  %v66 = vunpack.c.l.b16 %v14
  %v67 = vunpack.c.l.b16 %v15
  %v68 = vunpack.c.l.b16 %v16
  %v69 = vunpack.c.l.b16 %v17
  %v70 = vunpack.c.l.b16 %v18
  %v71 = vunpack.c.l.b16 %v19
  %v72 = vunpack.c.l.b16 %v20
  %v73 = vunpack.c.l.b16 %v21
  %v74 = vunpack.c.l.b16 %v22
  %v75 = vunpack.c.l.b16 %v23
  %v76 = vunpack.c.l.b16 %v24
  %v77 = vunpack.c.l.b16 %v25
  %v78 = vunpack.c.l.b16 %v26
  %v79 = vunpack.c.l.b16 %v27
  %v80 = vunpack.c.l.b16 %v28
  %v81 = vunpack.c.l.b16 %v29
  %v82 = vpack.c.b16 %v67, %v66
  %v83 = vpack.c.b16 %v69, %v68
  %v84 = vpack.c.b16 %v71, %v70
  %v85 = vpack.c.b16 %v73, %v72
  %v86 = vpack.c.b16 %v75, %v74
  %v87 = vpack.c.b16 %v77, %v76
  %v88 = vpack.c.b16 %v79, %v78
  %v89 = vpack.c.b16 %v81, %v80
  %v114 = vunpack.c.l.b16 %v30
  %v115 = vunpack.c.l.b16 %v31
  %v116 = vunpack.c.l.b16 %v32
  %v117 = vunpack.c.l.b16 %v33
  %v118 = vunpack.c.l.b16 %v34
  %v119 = vunpack.c.l.b16 %v35
  %v120 = vunpack.c.l.b16 %v36
  %v121 = vunpack.c.l.b16 %v37
  %v122 = vunpack.c.l.b16 %v38
  %v123 = vunpack.c.l.b16 %v39
  %v124 = vunpack.c.l.b16 %v40
  %v125 = vunpack.c.l.b16 %v41
  %v126 = vunpack.c.l.b16 %v42
  %v127 = vunpack.c.l.b16 %v43
  %v128 = vunpack.c.l.b16 %v44
  %v129 = vunpack.c.l.b16 %v45
  %v130 = vpack.c.b16 %v115, %v114
  %v131 = vpack.c.b16 %v117, %v116
  %v132 = vpack.c.b16 %v119, %v118
  %v133 = vpack.c.b16 %v121, %v120
  %v134 = vpack.c.b16 %v123, %v122
  %v135 = vpack.c.b16 %v125, %v124
  %v136 = vpack.c.b16 %v127, %v126
  %v137 = vpack.c.b16 %v129, %v128
  %146 = vmatpush.bf16.msra.mxu0 %v137
  %147 = vmatpush.bf16.msra.mxu0 %v136
  %148 = vmatpush.bf16.msra.mxu0 %v135
  %149 = vmatpush.bf16.msra.mxu0 %v134
  %150 = vmatpush.bf16.msra.mxu0 %v133
  %151 = vmatpush.bf16.msra.mxu0 %v132
  %152 = vmatpush.bf16.msra.mxu0 %v131
  %153 = vmatpush.bf16.msra.mxu0 %v130
  %154 = vmatmul.bf16.gmra.mxu0 %v82
  %v155 = vpop.f32.mrf.mxu0
  %v156 = vadd.f32 %v48, %v155
  %v157 = vpop.f32.mrf.mxu0
  %v158 = vadd.f32 %v48, %v157
  %159 = vmatmul.bf16.gmra.mxu0 %v83
  %v160 = vpop.f32.mrf.mxu0
  %v161 = vadd.f32 %v48, %v160
  %v162 = vpop.f32.mrf.mxu0
  %v163 = vadd.f32 %v48, %v162
  %164 = vmatmul.bf16.gmra.mxu0 %v84
  %v165 = vpop.f32.mrf.mxu0
  %v166 = vadd.f32 %v48, %v165
  %v167 = vpop.f32.mrf.mxu0
  %v168 = vadd.f32 %v48, %v167
  %169 = vmatmul.bf16.gmra.mxu0 %v85
  %v170 = vpop.f32.mrf.mxu0
  %v171 = vadd.f32 %v48, %v170
  %v172 = vpop.f32.mrf.mxu0
  %v173 = vadd.f32 %v48, %v172
  %174 = vmatmul.bf16.gmra.mxu0 %v86
  %v175 = vpop.f32.mrf.mxu0
  %v176 = vadd.f32 %v48, %v175
  %v177 = vpop.f32.mrf.mxu0
  %v178 = vadd.f32 %v48, %v177
  %179 = vmatmul.bf16.gmra.mxu0 %v87
  %v180 = vpop.f32.mrf.mxu0
  %v181 = vadd.f32 %v48, %v180
  %v182 = vpop.f32.mrf.mxu0
  %v183 = vadd.f32 %v48, %v182
  %184 = vmatmul.bf16.gmra.mxu0 %v88
  %v185 = vpop.f32.mrf.mxu0
  %v186 = vadd.f32 %v48, %v185
  %v187 = vpop.f32.mrf.mxu0
  %v188 = vadd.f32 %v48, %v187
  %189 = vmatmul.bf16.gmra.mxu0 %v89
  %v190 = vpop.f32.mrf.mxu0
  %v191 = vadd.f32 %v48, %v190
  %v192 = vpop.f32.mrf.mxu0
  %v193 = vadd.f32 %v48, %v192
  %194 = vdwg.mxu0
  %195 = vst [vmem:[%s3] sm:$0xff] %v156
  %196 = vst [vmem:[%s3 + $0x8] sm:$0xff] %v158
  %197 = vst [vmem:[%s3 + $0x10] sm:$0xff] %v161
  %198 = vst [vmem:[%s3 + $0x18] sm:$0xff] %v163
  %199 = vst [vmem:[%s3 + $0x20] sm:$0xff] %v166
  %200 = vst [vmem:[%s3 + $0x28] sm:$0xff] %v168
  %201 = vst [vmem:[%s3 + $0x30] sm:$0xff] %v171
  %202 = vst [vmem:[%s3 + $0x38] sm:$0xff] %v173
  %203 = vst [vmem:[%s3 + $0x40] sm:$0xff] %v176
  %204 = vst [vmem:[%s3 + $0x48] sm:$0xff] %v178
  %205 = vst [vmem:[%s3 + $0x50] sm:$0xff] %v181
  %206 = vst [vmem:[%s3 + $0x58] sm:$0xff] %v183
  %207 = vst [vmem:[%s3 + $0x60] sm:$0xff] %v186
  %208 = vst [vmem:[%s3 + $0x68] sm:$0xff] %v188
  %209 = vst [vmem:[%s3 + $0x70] sm:$0xff] %v191
  %210 = vst [vmem:[%s3 + $0x78] sm:$0xff] %v193
  // Predicated region
  $region14: #{vit_forward.1} parent=0 // pred_check
    _
  $region15: #{vit_forward.1} parent=0 // pred_check_branch
    %212 = sbr.rel (0) target = $region17
  $region16: #{vit_forward.1} parent=0 // pred_region
    _
  $region17: #{vit_forward.1} parent=0 // pred_fallthru
    _
  // Predicated region
  $region18: #{vit_forward.1} parent=0 // pred_check
    _
  $region19: #{vit_forward.1} parent=0 // pred_check_branch
    %214 = sbr.rel (0) target = $region21
  $region20: #{vit_forward.1} parent=0 // pred_region
    _
  $region21: #{vit_forward.1} parent=0 // pred_fallthru
    _

</llo_original>
